<compile_context>
chip_gen: v7x
topology: tpu7x:2x2x1
jax: 0.10.0
libtpu: 0.0.40
codegen_flags: <defaults>
</compile_context>

<pallas_src>
import jax
import jax.numpy as jnp
from jax.experimental import pallas as pl
from jax.experimental.pallas import tpu as pltpu

BN_EPS = 1e-5
OUT_LANES = 128  # lane-dense padded width of the final layer


def actor_kernel(x_ref, p_ref, w1_ref, w2_ref, w3_ref, out_ref):
    """Whole forward pass for one (small) batch, fully resident in VMEM.

    p_ref rows (f32, lane-padded to 256):
      0: bn0.gamma   1: bn0.beta
      2: bn1.gamma   3: bn1.beta
      4: bn2.gamma   5: bn2.beta
      6: fc3.bias (padded to OUT_LANES)   7: zero padding
    """
    S = w1_ref.shape[0]        # state_size
    F1 = w1_ref.shape[1]       # fc1_units
    F2 = w2_ref.shape[1]       # fc2_units
    A_pad = w3_ref.shape[1]    # lane-padded action width

    x = x_ref[...].astype(jnp.float32)
    inv_b = 1.0 / x.shape[0]   # static (compile-time) batch size

    def bn(v, gamma, beta):
        # single-pass training-mode batch stats, folded into one FMA
        mean = jnp.sum(v, axis=0, keepdims=True) * inv_b
        ex2 = jnp.sum(v * v, axis=0, keepdims=True) * inv_b
        var = jnp.maximum(ex2 - mean * mean, 0.0)
        scale = gamma * jax.lax.rsqrt(var + BN_EPS)   # rsqrt -> EUP (free slot)
        shift = beta - mean * scale
        return v * scale + shift

    g0 = p_ref[0:1, :S]
    b0 = p_ref[1:2, :S]
    g1 = p_ref[2:3, :F1]
    bt1 = p_ref[3:4, :F1]
    g2 = p_ref[4:5, :F2]
    bt2 = p_ref[5:6, :F2]
    bb3 = p_ref[6:7, :A_pad]

    # bn0
    h = bn(x, g0, b0)
    # fc1 -> bn1 -> relu   (fc1 bias omitted: cancelled by BN mean subtraction)
    h = jnp.dot(h.astype(jnp.bfloat16), w1_ref[...],
                preferred_element_type=jnp.float32)
    h = jnp.maximum(bn(h, g1, bt1), 0.0)
    # fc2 -> bn2 -> relu   (fc2 bias omitted: cancelled by BN mean subtraction)
    h = jnp.dot(h.astype(jnp.bfloat16), w2_ref[...],
                preferred_element_type=jnp.float32)
    h = jnp.maximum(bn(h, g2, bt2), 0.0)
    # fc3 -> tanh (lane-dense padded output)
    h = jnp.dot(h.astype(jnp.bfloat16), w3_ref[...],
                preferred_element_type=jnp.float32) + bb3
    out_ref[...] = jnp.tanh(h)


def actor_forward(state, params):
    """state: (B, state_size) or (state_size,). Returns squeezed actions."""
    if state.ndim == 1:
        state = state[None, :]
    state = state.astype(jnp.float32)
    B, S = state.shape
    F1 = params["w1"].shape[1]
    F2 = params["w2"].shape[1]
    A = params["w3"].shape[1]
    A_pad = OUT_LANES

    # Whole-batch-resident design: guard the VMEM ceiling (smallest on v7x).
    # TODO(synk): for very large B, switch to a two-pass BN (tiled stats pass
    # over an 'arbitrary' batch grid axis, then normalize+matmul pass) and
    # shard the batch over the 2 TensorCores on v7x.
    act_bytes = B * (S + F1 + F2 + A_pad) * 4
    assert act_bytes < 24 * 1024 * 1024, "batch too large for single-block kernel"

    # Pack all tiny (1,F) parameters into one (8, P_LANE) slab.
    P_LANE = max(S, F1, F2, A_pad)
    P_LANE = ((P_LANE + 127) // 128) * 128

    def row(v):
        v = jnp.reshape(v.astype(jnp.float32), (1, -1))
        return jnp.pad(v, ((0, 0), (0, P_LANE - v.shape[1])))

    packed = jnp.concatenate(
        [
            row(params["g0"]), row(params["b0"]),
            row(params["g1"]), row(params["bt1"]),
            row(params["g2"]), row(params["bt2"]),
            row(params["bb3"]),
            jnp.zeros((1, P_LANE), jnp.float32),
        ],
        axis=0,
    )  # (8, P_LANE)

    # MXU-native bf16 weights (f32 accumulation inside the kernel).
    w1 = params["w1"].astype(jnp.bfloat16)
    w2 = params["w2"].astype(jnp.bfloat16)
    w3 = jnp.pad(params["w3"], ((0, 0), (0, A_pad - A))).astype(jnp.bfloat16)

    flops = 2 * B * (S * F1 + F1 * F2 + F2 * A_pad)
    bytes_accessed = (state.size * 4 + packed.size * 4
                      + w1.size * 2 + w2.size * 2 + w3.size * 2
                      + B * A_pad * 4)
    transcendentals = B * A_pad + 3 * max(S, F1, F2)  # tanh + per-feature rsqrt

    vmem_spec = pl.BlockSpec(memory_space=pltpu.MemorySpace.VMEM)
    out = pl.pallas_call(
        actor_kernel,
        out_shape=jax.ShapeDtypeStruct((B, A_pad), jnp.float32),
        in_specs=[vmem_spec] * 5,
        out_specs=vmem_spec,
        compiler_params=pltpu.CompilerParams(vmem_limit_bytes=32 * 1024 * 1024),
        cost_estimate=pl.CostEstimate(
            flops=int(flops),
            transcendentals=int(transcendentals),
            bytes_accessed=int(bytes_accessed),
        ),
    )(state, packed, w1, w2, w3)
    return jnp.squeeze(out[:, :A])


def init_actor_params(key, state_size, action_size, fc1_units=256, fc2_units=128):
    """Deterministic synthetic init mimicking the torch reset_parameters()."""
    k1, k2, k3, k4, k5, k6 = jax.random.split(key, 6)

    # hidden_init uses weight.size()[0] == out_features (as in the reference code)
    lim1 = 1.0 / jnp.sqrt(jnp.float32(fc1_units))
    lim2 = 1.0 / jnp.sqrt(jnp.float32(fc2_units))

    # weights stored pre-transposed: (in_features, out_features)
    w1 = jax.random.uniform(k1, (state_size, fc1_units), jnp.float32, -lim1, lim1)
    w2 = jax.random.uniform(k2, (fc1_units, fc2_units), jnp.float32, -lim2, lim2)
    w3 = jax.random.uniform(k3, (fc2_units, action_size), jnp.float32, -3e-3, 3e-3)

    # biases: torch Linear default uniform(-1/sqrt(in), 1/sqrt(in)) (not reset).
    # bb1/bb2 are kept for reference-model fidelity but are NOT passed to the
    # kernel: they are exactly cancelled by the following BatchNorm.
    bb1 = jax.random.uniform(k4, (1, fc1_units), jnp.float32,
                             -1.0 / jnp.sqrt(jnp.float32(state_size)),
                             1.0 / jnp.sqrt(jnp.float32(state_size)))
    bb2 = jax.random.uniform(k5, (1, fc2_units), jnp.float32,
                             -1.0 / jnp.sqrt(jnp.float32(fc1_units)),
                             1.0 / jnp.sqrt(jnp.float32(fc1_units)))
    bb3 = jax.random.uniform(k6, (1, action_size), jnp.float32,
                             -1.0 / jnp.sqrt(jnp.float32(fc2_units)),
                             1.0 / jnp.sqrt(jnp.float32(fc2_units)))

    # BatchNorm affine params: default gamma=1, beta=0
    return {
        "g0": jnp.ones((1, state_size), jnp.float32),
        "b0": jnp.zeros((1, state_size), jnp.float32),
        "w1": w1, "bb1": bb1,
        "g1": jnp.ones((1, fc1_units), jnp.float32),
        "bt1": jnp.zeros((1, fc1_units), jnp.float32),
        "w2": w2, "bb2": bb2,
        "g2": jnp.ones((1, fc2_units), jnp.float32),
        "bt2": jnp.zeros((1, fc2_units), jnp.float32),
        "w3": w3, "bb3": bb3,
    }


def actor_forward_ref(state, params):
    """Pure-JAX f32 reference matching the torch module exactly."""
    if state.ndim == 1:
        state = state[None, :]

    def bn(v, g, b):
        m = jnp.mean(v, axis=0, keepdims=True)
        var = jnp.mean((v - m) ** 2, axis=0, keepdims=True)
        return g * (v - m) / jnp.sqrt(var + BN_EPS) + b

    h = bn(state, params["g0"], params["b0"])
    h = jax.nn.relu(bn(h @ params["w1"] + params["bb1"], params["g1"], params["bt1"]))
    h = jax.nn.relu(bn(h @ params["w2"] + params["bb2"], params["g2"], params["bt2"]))
    h = jnp.tanh(h @ params["w3"] + params["bb3"])
    return jnp.squeeze(h)


if __name__ == "__main__":
    key = jax.random.PRNGKey(0)
    k_param, k_state = jax.random.split(key)

    B, STATE_SIZE, ACTION_SIZE = 8, 32, 4
    FC1, FC2 = 256, 128

    params = init_actor_params(k_param, STATE_SIZE, ACTION_SIZE, FC1, FC2)
    state = jax.random.normal(k_state, (B, STATE_SIZE), jnp.float32)

    out = actor_forward(state, params)
    out = jax.block_until_ready(out)

    ref = actor_forward_ref(state, params)
    assert out.shape == (B, ACTION_SIZE), out.shape
    # bf16 MXU inputs with f32 accumulation -> loosened tolerance
    assert jnp.allclose(out, ref, atol=2e-2, rtol=0.0), (
        "mismatch vs reference; max abs err = %s" % jnp.max(jnp.abs(out - ref)))

    print("KERNEL_OK")
</pallas_src>

<mosaic_0001>
module attributes {stable_mosaic.version = 11 : i64} {
  func.func @actor_kernel(%arg0: memref<8x32xf32, #tpu.memory_space<vmem>>, %arg1: memref<8x256xf32, #tpu.memory_space<vmem>>, %arg2: memref<32x256xbf16, #tpu.memory_space<vmem>>, %arg3: memref<256x128xbf16, #tpu.memory_space<vmem>>, %arg4: memref<128x128xbf16, #tpu.memory_space<vmem>>, %arg5: memref<8x128xf32, #tpu.memory_space<vmem>>) attributes {dimension_semantics = [], scalar_prefetch = 0 : i64, scratch_operands = 0 : i64, tpu.core_type = #tpu.core_type<tc>} {
    %c0 = arith.constant 0 : index
    %c0_0 = arith.constant 0 : index
    %0 = vector.load %arg0[%c0, %c0_0] : memref<8x32xf32, #tpu.memory_space<vmem>>, vector<8x32xf32>
    %c0_1 = arith.constant 0 : index
    %c0_2 = arith.constant 0 : index
    %1 = vector.load %arg1[%c0_1, %c0_2] : memref<8x256xf32, #tpu.memory_space<vmem>>, vector<1x32xf32>
    %c1 = arith.constant 1 : index
    %c0_3 = arith.constant 0 : index
    %2 = vector.load %arg1[%c1, %c0_3] : memref<8x256xf32, #tpu.memory_space<vmem>>, vector<1x32xf32>
    %c2 = arith.constant 2 : index
    %c0_4 = arith.constant 0 : index
    %3 = vector.load %arg1[%c2, %c0_4] : memref<8x256xf32, #tpu.memory_space<vmem>>, vector<1x256xf32>
    %c3 = arith.constant 3 : index
    %c0_5 = arith.constant 0 : index
    %4 = vector.load %arg1[%c3, %c0_5] : memref<8x256xf32, #tpu.memory_space<vmem>>, vector<1x256xf32>
    %c4 = arith.constant 4 : index
    %c0_6 = arith.constant 0 : index
    %5 = vector.load %arg1[%c4, %c0_6] : memref<8x256xf32, #tpu.memory_space<vmem>>, vector<1x128xf32>
    %c5 = arith.constant 5 : index
    %c0_7 = arith.constant 0 : index
    %6 = vector.load %arg1[%c5, %c0_7] : memref<8x256xf32, #tpu.memory_space<vmem>>, vector<1x128xf32>
    %c6 = arith.constant 6 : index
    %c0_8 = arith.constant 0 : index
    %7 = vector.load %arg1[%c6, %c0_8] : memref<8x256xf32, #tpu.memory_space<vmem>>, vector<1x128xf32>
    %cst = arith.constant dense<0.000000e+00> : vector<32xf32>
    %8 = vector.multi_reduction <add>, %0, %cst [0] : vector<8x32xf32> to vector<32xf32>
    %9 = vector.shape_cast %8 : vector<32xf32> to vector<1x32xf32>
    %cst_9 = arith.constant 1.250000e-01 : f32
    %10 = vector.broadcast %cst_9 : f32 to vector<1x32xf32>
    %11 = arith.mulf %9, %10 : vector<1x32xf32>
    %12 = arith.mulf %0, %0 : vector<8x32xf32>
    %cst_10 = arith.constant dense<0.000000e+00> : vector<32xf32>
    %13 = vector.multi_reduction <add>, %12, %cst_10 [0] : vector<8x32xf32> to vector<32xf32>
    %14 = vector.shape_cast %13 : vector<32xf32> to vector<1x32xf32>
    %cst_11 = arith.constant 1.250000e-01 : f32
    %15 = vector.broadcast %cst_11 : f32 to vector<1x32xf32>
    %16 = arith.mulf %14, %15 : vector<1x32xf32>
    %17 = arith.mulf %11, %11 : vector<1x32xf32>
    %18 = arith.subf %16, %17 : vector<1x32xf32>
    %cst_12 = arith.constant 0.000000e+00 : f32
    %19 = vector.broadcast %cst_12 : f32 to vector<1x32xf32>
    %20 = arith.maximumf %18, %19 : vector<1x32xf32>
    %cst_13 = arith.constant 9.99999974E-6 : f32
    %21 = vector.broadcast %cst_13 : f32 to vector<1x32xf32>
    %22 = arith.addf %20, %21 : vector<1x32xf32>
    %23 = math.rsqrt %22 : vector<1x32xf32>
    %24 = arith.mulf %1, %23 : vector<1x32xf32>
    %25 = arith.mulf %11, %24 : vector<1x32xf32>
    %26 = arith.subf %2, %25 : vector<1x32xf32>
    %27 = vector.broadcast %24 : vector<1x32xf32> to vector<8x32xf32>
    %28 = arith.mulf %0, %27 : vector<8x32xf32>
    %29 = vector.broadcast %26 : vector<1x32xf32> to vector<8x32xf32>
    %30 = arith.addf %28, %29 : vector<8x32xf32>
    %31 = arith.truncf %30 : vector<8x32xf32> to vector<8x32xbf16>
    %c0_14 = arith.constant 0 : index
    %c0_15 = arith.constant 0 : index
    %32 = vector.load %arg2[%c0_14, %c0_15] : memref<32x256xbf16, #tpu.memory_space<vmem>>, vector<32x256xbf16>
    %cst_16 = arith.constant dense<0.000000e+00> : vector<8x256xf32>
    %33 = tpu.matmul %31, %32, %cst_16 {dimension_numbers = #tpu.dot_dimension_numbers<[1], [0], [0], [1], [0, 0, 1, 1], [], []>} : vector<8x32xbf16>, vector<32x256xbf16>, vector<8x256xf32> -> vector<8x256xf32>
    %cst_17 = arith.constant dense<0.000000e+00> : vector<256xf32>
    %34 = vector.multi_reduction <add>, %33, %cst_17 [0] : vector<8x256xf32> to vector<256xf32>
    %35 = vector.shape_cast %34 : vector<256xf32> to vector<1x256xf32>
    %cst_18 = arith.constant 1.250000e-01 : f32
    %36 = vector.broadcast %cst_18 : f32 to vector<1x256xf32>
    %37 = arith.mulf %35, %36 : vector<1x256xf32>
    %38 = arith.mulf %33, %33 : vector<8x256xf32>
    %cst_19 = arith.constant dense<0.000000e+00> : vector<256xf32>
    %39 = vector.multi_reduction <add>, %38, %cst_19 [0] : vector<8x256xf32> to vector<256xf32>
    %40 = vector.shape_cast %39 : vector<256xf32> to vector<1x256xf32>
    %cst_20 = arith.constant 1.250000e-01 : f32
    %41 = vector.broadcast %cst_20 : f32 to vector<1x256xf32>
    %42 = arith.mulf %40, %41 : vector<1x256xf32>
    %43 = arith.mulf %37, %37 : vector<1x256xf32>
    %44 = arith.subf %42, %43 : vector<1x256xf32>
    %cst_21 = arith.constant 0.000000e+00 : f32
    %45 = vector.broadcast %cst_21 : f32 to vector<1x256xf32>
    %46 = arith.maximumf %44, %45 : vector<1x256xf32>
    %cst_22 = arith.constant 9.99999974E-6 : f32
    %47 = vector.broadcast %cst_22 : f32 to vector<1x256xf32>
    %48 = arith.addf %46, %47 : vector<1x256xf32>
    %49 = math.rsqrt %48 : vector<1x256xf32>
    %50 = arith.mulf %3, %49 : vector<1x256xf32>
    %51 = arith.mulf %37, %50 : vector<1x256xf32>
    %52 = arith.subf %4, %51 : vector<1x256xf32>
    %53 = vector.broadcast %50 : vector<1x256xf32> to vector<8x256xf32>
    %54 = arith.mulf %33, %53 : vector<8x256xf32>
    %55 = vector.broadcast %52 : vector<1x256xf32> to vector<8x256xf32>
    %56 = arith.addf %54, %55 : vector<8x256xf32>
    %cst_23 = arith.constant 0.000000e+00 : f32
    %57 = vector.broadcast %cst_23 : f32 to vector<8x256xf32>
    %58 = arith.maximumf %56, %57 : vector<8x256xf32>
    %59 = arith.truncf %58 : vector<8x256xf32> to vector<8x256xbf16>
    %c0_24 = arith.constant 0 : index
    %c0_25 = arith.constant 0 : index
    %60 = vector.load %arg3[%c0_24, %c0_25] : memref<256x128xbf16, #tpu.memory_space<vmem>>, vector<256x128xbf16>
    %cst_26 = arith.constant dense<0.000000e+00> : vector<8x128xf32>
    %61 = tpu.matmul %59, %60, %cst_26 {dimension_numbers = #tpu.dot_dimension_numbers<[1], [0], [0], [1], [0, 0, 1, 1], [], []>} : vector<8x256xbf16>, vector<256x128xbf16>, vector<8x128xf32> -> vector<8x128xf32>
    %cst_27 = arith.constant dense<0.000000e+00> : vector<128xf32>
    %62 = vector.multi_reduction <add>, %61, %cst_27 [0] : vector<8x128xf32> to vector<128xf32>
    %63 = vector.shape_cast %62 : vector<128xf32> to vector<1x128xf32>
    %cst_28 = arith.constant 1.250000e-01 : f32
    %64 = vector.broadcast %cst_28 : f32 to vector<1x128xf32>
    %65 = arith.mulf %63, %64 : vector<1x128xf32>
    %66 = arith.mulf %61, %61 : vector<8x128xf32>
    %cst_29 = arith.constant dense<0.000000e+00> : vector<128xf32>
    %67 = vector.multi_reduction <add>, %66, %cst_29 [0] : vector<8x128xf32> to vector<128xf32>
    %68 = vector.shape_cast %67 : vector<128xf32> to vector<1x128xf32>
    %cst_30 = arith.constant 1.250000e-01 : f32
    %69 = vector.broadcast %cst_30 : f32 to vector<1x128xf32>
    %70 = arith.mulf %68, %69 : vector<1x128xf32>
    %71 = arith.mulf %65, %65 : vector<1x128xf32>
    %72 = arith.subf %70, %71 : vector<1x128xf32>
    %cst_31 = arith.constant 0.000000e+00 : f32
    %73 = vector.broadcast %cst_31 : f32 to vector<1x128xf32>
    %74 = arith.maximumf %72, %73 : vector<1x128xf32>
    %cst_32 = arith.constant 9.99999974E-6 : f32
    %75 = vector.broadcast %cst_32 : f32 to vector<1x128xf32>
    %76 = arith.addf %74, %75 : vector<1x128xf32>
    %77 = math.rsqrt %76 : vector<1x128xf32>
    %78 = arith.mulf %5, %77 : vector<1x128xf32>
    %79 = arith.mulf %65, %78 : vector<1x128xf32>
    %80 = arith.subf %6, %79 : vector<1x128xf32>
    %81 = vector.broadcast %78 : vector<1x128xf32> to vector<8x128xf32>
    %82 = arith.mulf %61, %81 : vector<8x128xf32>
    %83 = vector.broadcast %80 : vector<1x128xf32> to vector<8x128xf32>
    %84 = arith.addf %82, %83 : vector<8x128xf32>
    %cst_33 = arith.constant 0.000000e+00 : f32
    %85 = vector.broadcast %cst_33 : f32 to vector<8x128xf32>
    %86 = arith.maximumf %84, %85 : vector<8x128xf32>
    %87 = arith.truncf %86 : vector<8x128xf32> to vector<8x128xbf16>
    %c0_34 = arith.constant 0 : index
    %c0_35 = arith.constant 0 : index
    %88 = vector.load %arg4[%c0_34, %c0_35] : memref<128x128xbf16, #tpu.memory_space<vmem>>, vector<128x128xbf16>
    %cst_36 = arith.constant dense<0.000000e+00> : vector<8x128xf32>
    %89 = tpu.matmul %87, %88, %cst_36 {dimension_numbers = #tpu.dot_dimension_numbers<[1], [0], [0], [1], [0, 0, 1, 1], [], []>} : vector<8x128xbf16>, vector<128x128xbf16>, vector<8x128xf32> -> vector<8x128xf32>
    %90 = vector.broadcast %7 : vector<1x128xf32> to vector<8x128xf32>
    %91 = arith.addf %89, %90 : vector<8x128xf32>
    %92 = math.tanh %91 : vector<8x128xf32>
    %c0_37 = arith.constant 0 : index
    %c0_38 = arith.constant 0 : index
    %93 = vector.load %arg5[%c0_37, %c0_38] : memref<8x128xf32, #tpu.memory_space<vmem>>, vector<8x128xf32>
    tpu.vector_store %arg5[%c0_37, %c0_38], %92 {strides = array<i32>} : memref<8x128xf32, #tpu.memory_space<vmem>>, vector<8x128xf32>,
    return
  }
}

</mosaic_0001>

<llo_original>
// kernel: tpu_custom_call.1
$region0: #{tpu_custom_call.1}
  #allocation0 [shape = 'u32[]', space=smem, size = 0x4, offset = 0x4, fixed_abs, tag = 'smem constant byte address 0x4 - core index']
  #allocation1 [shape = 'u32[144,128]{1,0:T(1,128)}', space=vmem, size = 0x12000, scoped, tag = 'internal scratch']
  %s0 = inlined_call_operand.hbm [shape: f32[8,32], index: 0, kind: input, shape index: {}]
  %s1 = inlined_call_operand.hbm [shape: f32[8,256], index: 1, kind: input, shape index: {}]
  %s2 = inlined_call_operand.hbm [shape: bf16[32,256], index: 2, kind: input, shape index: {}]
  %s3 = inlined_call_operand.hbm [shape: bf16[256,128], index: 3, kind: input, shape index: {}]
  %s4 = inlined_call_operand.hbm [shape: bf16[128,128], index: 4, kind: input, shape index: {}]
  %s5 = inlined_call_operand.hbm [shape: f32[8,128], index: 5, kind: output, shape index: {}]
  %s6 = sld [smem:[#allocation0]]
  $region50: #{tpu_custom_call.1} parent=0
    _
  %s8 = ssub.s32 1, %s6
  %s9 = scalar_select 0, %s8, %s6
  $region1: #{tpu_custom_call.1} parent=0
    #allocation2 [shape = 'u8[4096]{0}', space=vmem, size = 0x1000, scoped, tag = 'input window, operand 0, single buffered']
    #allocation3 [shape = 's32[1]{0}', space=sflag, size = 0x4, scoped, tag = 'scoped memory for tpu_custom_call.1']
    #allocation4 [shape = 's32[1]{0}', space=sflag, size = 0x4, scoped, tag = 'scoped memory for tpu_custom_call.1']
    #allocation5 [shape = 'u8[8192]{0}', space=vmem, size = 0x2000, scoped, tag = 'input window, operand 1, single buffered']
    #allocation6 [shape = 's32[1]{0}', space=sflag, size = 0x4, scoped, tag = 'scoped memory for tpu_custom_call.1']
    #allocation7 [shape = 'u8[16384]{0}', space=vmem, size = 0x4000, scoped, tag = 'input window, operand 2, single buffered']
    #allocation8 [shape = 'u8[65536]{0}', space=vmem, size = 0x10000, scoped, tag = 'input window, operand 3, single buffered']
    #allocation9 [shape = 's32[1]{0}', space=sflag, size = 0x4, scoped, tag = 'scoped memory for tpu_custom_call.1']
    #allocation10 [shape = 'u8[32768]{0}', space=vmem, size = 0x8000, scoped, tag = 'input window, operand 4, single buffered']
    #allocation11 [shape = 'u8[4096]{0}', space=vmem, size = 0x1000, scoped, tag = 'output window, operand 0, single buffered']
    %10 = vsyncpa [#allocation3], 0
    %11 = vsyncpa [#allocation6], 0
    %12 = vsyncpa [#allocation9], 0
    %13 = vsyncpa [#allocation4], 0
    // Predicated region
    $region2: #{tpu_custom_call.1} parent=1 // pred_check
      _
    $region3: #{tpu_custom_call.1} parent=1 // pred_check_branch
      %15 = sbr.rel (0) target = $region5
    $region4: #{tpu_custom_call.1} parent=1 // pred_region
      %s17 = ssub.s32 128, 128
      %18 = vsyncadd [#allocation3], %s17
      %s20 = sshll.u32 [#allocation2], 4
      %s21 = int_to_ptr.vmem [resolvable:$true] %s20
      %23 = dma.hbm_to_vmem [thread:$0]  %s0, 128, %s21, [#allocation3]
    $region5: #{tpu_custom_call.1} parent=1 // pred_fallthru
      _
    // Predicated region
    $region6: #{tpu_custom_call.1} parent=1 // pred_check
      _
    $region7: #{tpu_custom_call.1} parent=1 // pred_check_branch
      %25 = sbr.rel (0) target = $region9
    $region8: #{tpu_custom_call.1} parent=1 // pred_region
      %s27 = ssub.s32 256, 256
      %28 = vsyncadd [#allocation6], %s27
      %s30 = sshll.u32 [#allocation5], 4
      %s31 = int_to_ptr.vmem [resolvable:$true] %s30
      %33 = dma.hbm_to_vmem [thread:$0]  %s1, 256, %s31, [#allocation6]
    $region9: #{tpu_custom_call.1} parent=1 // pred_fallthru
      _
    // Predicated region
    $region10: #{tpu_custom_call.1} parent=1 // pred_check
      _
    $region11: #{tpu_custom_call.1} parent=1 // pred_check_branch
      %35 = sbr.rel (0) target = $region13
    $region12: #{tpu_custom_call.1} parent=1 // pred_region
      %s37 = ssub.s32 512, 512
      %38 = vsyncadd [#allocation6], %s37
      %s39 = sshll.u32 [#allocation7], 4
      %s40 = int_to_ptr.vmem [resolvable:$true] %s39
      %45 = dma.hbm_to_vmem [thread:$0]  %s2, 512, %s40, [#allocation6], 128, 128, 8
    $region13: #{tpu_custom_call.1} parent=1 // pred_fallthru
      _
    // Predicated region
    $region14: #{tpu_custom_call.1} parent=1 // pred_check
      _
    $region15: #{tpu_custom_call.1} parent=1 // pred_check_branch
      %47 = sbr.rel (0) target = $region17
    $region16: #{tpu_custom_call.1} parent=1 // pred_region
      %s49 = ssub.s32 2048, 2048
      %50 = vsyncadd [#allocation9], %s49
      %s51 = sshll.u32 [#allocation8], 4
      %s52 = int_to_ptr.vmem [resolvable:$true] %s51
      %57 = dma.hbm_to_vmem [thread:$0]  %s3, 2048, %s52, [#allocation9], 64, 64, 4
    $region17: #{tpu_custom_call.1} parent=1 // pred_fallthru
      _
    // Predicated region
    $region18: #{tpu_custom_call.1} parent=1 // pred_check
      _
    $region19: #{tpu_custom_call.1} parent=1 // pred_check_branch
      %59 = sbr.rel (0) target = $region21
    $region20: #{tpu_custom_call.1} parent=1 // pred_region
      %s61 = ssub.s32 1024, 1024
      %62 = vsyncadd [#allocation9], %s61
      %s63 = sshll.u32 [#allocation10], 4
      %s64 = int_to_ptr.vmem [resolvable:$true] %s63
      %69 = dma.hbm_to_vmem [thread:$0]  %s4, 1024, %s64, [#allocation9], 64, 64, 4
    $region21: #{tpu_custom_call.1} parent=1 // pred_fallthru
      _
    // Predicated region
    $region22: #{tpu_custom_call.1} parent=1 // pred_check
      _
    $region23: #{tpu_custom_call.1} parent=1 // pred_check_branch
      %71 = sbr.rel (0) target = $region25
    $region24: #{tpu_custom_call.1} parent=1 // pred_region
      %72 = dma.done [#allocation3], 128
    $region25: #{tpu_custom_call.1} parent=1 // pred_fallthru
      _
    // Predicated region
    $region26: #{tpu_custom_call.1} parent=1 // pred_check
      _
    $region27: #{tpu_custom_call.1} parent=1 // pred_check_branch
      %74 = sbr.rel (0) target = $region29
    $region28: #{tpu_custom_call.1} parent=1 // pred_region
      %75 = dma.done [#allocation6], 256
    $region29: #{tpu_custom_call.1} parent=1 // pred_fallthru
      _
    // Predicated region
    $region30: #{tpu_custom_call.1} parent=1 // pred_check
      _
    $region31: #{tpu_custom_call.1} parent=1 // pred_check_branch
      %77 = sbr.rel (0) target = $region33
    $region32: #{tpu_custom_call.1} parent=1 // pred_region
      %78 = dma.done [#allocation6], 512
    $region33: #{tpu_custom_call.1} parent=1 // pred_fallthru
      _
    // Predicated region
    $region34: #{tpu_custom_call.1} parent=1 // pred_check
      _
    $region35: #{tpu_custom_call.1} parent=1 // pred_check_branch
      %80 = sbr.rel (0) target = $region37
    $region36: #{tpu_custom_call.1} parent=1 // pred_region
      %81 = dma.done [#allocation9], 2048
    $region37: #{tpu_custom_call.1} parent=1 // pred_fallthru
      _
    // Predicated region
    $region38: #{tpu_custom_call.1} parent=1 // pred_check
      _
    $region39: #{tpu_custom_call.1} parent=1 // pred_check_branch
      %83 = sbr.rel (0) target = $region41
    $region40: #{tpu_custom_call.1} parent=1 // pred_region
      %84 = dma.done [#allocation9], 1024
    $region41: #{tpu_custom_call.1} parent=1 // pred_fallthru
      _
    %v86 = vld [vmem:[#allocation2] sm:$0xff]
    %v87 = vld [vmem:[#allocation5] ss:$0 sm:$0xff]
    %v88 = vld [vmem:[#allocation5 + $0x1] ss:$0 sm:$0xff]
    %s89 = scalar_lea.vmem [#allocation5], 2
    %v90 = vld [vmem:[%s89] ss:$8 sm:$0x3]
    %s91 = scalar_lea.vmem [#allocation5], 3
    %v92 = vld [vmem:[%s91] ss:$8 sm:$0x3]
    %v93 = vld [vmem:[#allocation5 + $0x4] ss:$0 sm:$0xff]
    %v94 = vld [vmem:[#allocation5 + $0x5] ss:$0 sm:$0xff]
    %v95 = vld [vmem:[#allocation5 + $0x6] ss:$0 sm:$0xff]
    %vm96 = vcmask 261120
    %v97 = vsel %vm96, %v86, 0.0
    %v98 = vrot.slane %v97, 4
    %v99 = vadd.f32 %v97, %v98
    %v100 = vrot.slane %v99, 2
    %v101 = vadd.f32 %v99, %v100
    %v102 = vrot.slane %v101, 1
    %v103 = vadd.f32 %v101, %v102
    %v104 = vmul.f32 %v103, 0.125
    %v105 = vmul.f32 %v86, %v86
    %v106 = vsel %vm96, %v105, 0.0
    %v107 = vrot.slane %v106, 4
    %v108 = vadd.f32 %v106, %v107
    %v109 = vrot.slane %v108, 2
    %v110 = vadd.f32 %v108, %v109
    %v111 = vrot.slane %v110, 1
    %v112 = vadd.f32 %v110, %v111
    %v113 = vmul.f32 %v112, 0.125
    %v114 = vmul.f32 %v104, %v104
    %v115 = vsub.f32 %v113, %v114
    %v116 = vmax.f32 %v115, 0.0
    %v117 = vadd.f32 %v116, 1e-05
    %v118 = vrsqrt.pop %v117
    %v119 = vmul.f32 %v87, %v118
    %v120 = vmul.f32 %v104, %v119
    %v121 = vsub.f32 %v88, %v120
    %v122 = vmul.f32 %v86, %v119
    %v123 = vadd.f32 %v122, %v121
    %v124 = vpack.c.bf16 %v123, %v123
    %v125 = vld [vmem:[#allocation7] sm:$0xff]
    %v126 = vld [vmem:[#allocation7 + $0x8] sm:$0xff]
    %v127 = vld [vmem:[#allocation7 + $0x10] sm:$0xff]
    %v128 = vld [vmem:[#allocation7 + $0x18] sm:$0xff]
    %v133 = vunpack.c.l.b16 %v125
    %v134 = vunpack.c.h.b16 %v125
    %v135 = vunpack.c.l.b16 %v126
    %v136 = vunpack.c.h.b16 %v126
    %v137 = vunpack.c.l.b16 %v127
    %v138 = vunpack.c.h.b16 %v127
    %v139 = vunpack.c.l.b16 %v128
    %v140 = vunpack.c.h.b16 %v128
    %v141 = vpack.c.b16 %v135, %v133
    %v142 = vpack.c.b16 %v136, %v134
    %v143 = vpack.c.b16 %v139, %v137
    %v144 = vpack.c.b16 %v140, %v138
    %v150 = vsel %vm96, %v124, 0
    %152 = vmatprep.subr.bf16.mxu0 %v142
    %153 = vmatpush1.bf16.msra.mxu0 %v141
    %154 = vmatprep.subr.bf16.mxu0 %v144
    %155 = vmatpush1.bf16.msra.mxu0 %v143
    %156 = vmatprep.subr.bf16.mxu0 0
    %157 = vmatpush1.bf16.msra.mxu0 0
    %158 = vmatprep.subr.bf16.mxu0 0
    %159 = vmatpush1.bf16.msra.mxu0 0
    %160 = vmatprep.subr.bf16.mxu0 0
    %161 = vmatpush1.bf16.msra.mxu0 0
    %162 = vmatprep.subr.bf16.mxu0 0
    %163 = vmatpush1.bf16.msra.mxu0 0
    %164 = vmatprep.subr.bf16.mxu0 0
    %165 = vmatpush1.bf16.msra.mxu0 0
    %166 = vmatprep.subr.bf16.mxu0 0
    %167 = vmatpush1.bf16.msra.mxu0 0
    %168 = vmatprep.subr.bf16.mxu0 0
    %169 = vmatpush1.bf16.msra.mxu0 0
    %170 = vmatprep.subr.bf16.mxu0 0
    %171 = vmatpush1.bf16.msra.mxu0 0
    %172 = vmatprep.subr.bf16.mxu0 0
    %173 = vmatpush1.bf16.msra.mxu0 0
    %174 = vmatprep.subr.bf16.mxu0 0
    %175 = vmatpush1.bf16.msra.mxu0 0
    %176 = vmatprep.subr.bf16.mxu0 0
    %177 = vmatpush1.bf16.msra.mxu0 0
    %178 = vmatprep.subr.bf16.mxu0 0
    %179 = vmatpush1.bf16.msra.mxu0 0
    %180 = vmatprep.subr.bf16.mxu0 0
    %181 = vmatpush1.bf16.msra.mxu0 0
    %182 = vmatprep.subr.bf16.mxu0 0
    %183 = vmatpush1.bf16.msra.mxu0 0
    %184 = vmatprep.mubr.bf16.mxu0 0
    %185 = vmatmul.mubr.bf16.gmra.mrb[0].mxu0 %v150
    %v186 = vpop.f32.mrb[0].mxu0
    %v187 = vadd.f32 0.0, %v186
    %v188 = vpop.f32.mrb[0].mxu0
    %v189 = vadd.f32 0.0, %v188
    %v190 = vpop.f32.mrb[0].mxu0
    %v191 = vpop.f32.mrb[0].mxu0
    %192 = vdwg.mxu0
    %v193 = vrot.slane %v187, 4
    %v194 = vadd.f32 %v187, %v193
    %v195 = vrot.slane %v194, 2
    %v196 = vadd.f32 %v194, %v195
    %v197 = vrot.slane %v196, 1
    %v198 = vadd.f32 %v196, %v197
    %v199 = vrot.slane %v189, 4
    %v200 = vadd.f32 %v189, %v199
    %v201 = vrot.slane %v200, 2
    %v202 = vadd.f32 %v200, %v201
    %v203 = vrot.slane %v202, 1
    %v204 = vadd.f32 %v202, %v203
    %v205 = vmul.f32 %v198, 0.125
    %v206 = vmul.f32 %v204, 0.125
    %v207 = vmul.f32 %v187, %v187
    %v208 = vmul.f32 %v189, %v189
    %v209 = vrot.slane %v207, 4
    %v210 = vadd.f32 %v207, %v209
    %v211 = vrot.slane %v210, 2
    %v212 = vadd.f32 %v210, %v211
    %v213 = vrot.slane %v212, 1
    %v214 = vadd.f32 %v212, %v213
    %v215 = vrot.slane %v208, 4
    %v216 = vadd.f32 %v208, %v215
    %v217 = vrot.slane %v216, 2
    %v218 = vadd.f32 %v216, %v217
    %v219 = vrot.slane %v218, 1
    %v220 = vadd.f32 %v218, %v219
    %v221 = vmul.f32 %v214, 0.125
    %v222 = vmul.f32 %v220, 0.125
    %v223 = vmul.f32 %v205, %v205
    %v224 = vmul.f32 %v206, %v206
    %v225 = vsub.f32 %v221, %v223
    %v226 = vsub.f32 %v222, %v224
    %v227 = vmax.f32 %v225, 0.0
    %v228 = vmax.f32 %v226, 0.0
    %v229 = vadd.f32 %v227, 1e-05
    %v230 = vadd.f32 %v228, 1e-05
    %v231 = vrsqrt.pop %v229
    %v232 = vrsqrt.pop %v230
    %v235 = vcombine.low %v231, %v232
    %v237 = vunpack.c.l.s4 1966171168
    %v238 = vunpack.c.0.s8 %v237
    %v239 = vlaneseq
    %v240 = vshrl.u32 %v239, 7
    %v241 = vsub.s32 %v238, %v240
    %v242 = vrot.slane %v235, %v241
    %v244 = vunpack.c.l.s4 1966171168
    %v245 = vunpack.c.0.s8 %v244
    %v246 = vlaneseq
    %v247 = vshrl.u32 %v246, 7
    %v248 = vsub.s32 %v245, %v247
    %v249 = vrot.slane %v242, %v248
    %v251 = vmul.f32 %v90, %v249
    %v253 = vlaneseq
    %v254 = vshrl.u32 %v253, 7
    %v255 = vsub.s32 0, %v254
    %v256 = vrot.slane %v251, %v255
    %v257 = vlaneseq
    %v258 = vshrl.u32 %v257, 7
    %v259 = vsub.s32 1, %v258
    %v260 = vrot.slane %v251, %v259
    %v263 = vmul.f32 %v205, %v256
    %v264 = vmul.f32 %v206, %v260
    %v267 = vcombine.low %v263, %v264
    %v269 = vunpack.c.l.s4 1966171168
    %v270 = vunpack.c.0.s8 %v269
    %v271 = vlaneseq
    %v272 = vshrl.u32 %v271, 7
    %v273 = vsub.s32 %v270, %v272
    %v274 = vrot.slane %v267, %v273
    %v276 = vunpack.c.l.s4 1966171168
    %v277 = vunpack.c.0.s8 %v276
    %v278 = vlaneseq
    %v279 = vshrl.u32 %v278, 7
    %v280 = vsub.s32 %v277, %v279
    %v281 = vrot.slane %v274, %v280
    %v283 = vsub.f32 %v92, %v281
    %v284 = vmul.f32 %v187, %v256
    %v285 = vmul.f32 %v189, %v260
    %v287 = vlaneseq
    %v288 = vshrl.u32 %v287, 7
    %v289 = vsub.s32 0, %v288
    %v290 = vrot.slane %v283, %v289
    %v291 = vlaneseq
    %v292 = vshrl.u32 %v291, 7
    %v293 = vsub.s32 1, %v292
    %v294 = vrot.slane %v283, %v293
    %v297 = vadd.f32 %v284, %v290
    %v298 = vadd.f32 %v285, %v294
    %v299 = vmax.f32 %v297, 0.0
    %v300 = vmax.f32 %v298, 0.0
    %v301 = vpack.c.bf16 %v299, %v299
    %v302 = vpack.c.bf16 %v300, %v300
    %v303 = vld [vmem:[#allocation8] sm:$0xf]
    %v304 = vld [vmem:[#allocation8 + $0x4] sm:$0xf]
    %v305 = vld [vmem:[#allocation8 + $0x8] sm:$0xf]
    %v306 = vld [vmem:[#allocation8 + $0xc] sm:$0xf]
    %v307 = vld [vmem:[#allocation8 + $0x10] sm:$0xf]
    %v308 = vld [vmem:[#allocation8 + $0x14] sm:$0xf]
    %v309 = vld [vmem:[#allocation8 + $0x18] sm:$0xf]
    %v310 = vld [vmem:[#allocation8 + $0x1c] sm:$0xf]
    %v311 = vld [vmem:[#allocation8 + $0x20] sm:$0xf]
    %v312 = vld [vmem:[#allocation8 + $0x24] sm:$0xf]
    %v313 = vld [vmem:[#allocation8 + $0x28] sm:$0xf]
    %v314 = vld [vmem:[#allocation8 + $0x2c] sm:$0xf]
    %v315 = vld [vmem:[#allocation8 + $0x30] sm:$0xf]
    %v316 = vld [vmem:[#allocation8 + $0x34] sm:$0xf]
    %v317 = vld [vmem:[#allocation8 + $0x38] sm:$0xf]
    %v318 = vld [vmem:[#allocation8 + $0x3c] sm:$0xf]
    %v319 = vld [vmem:[#allocation8 + $0x40] sm:$0xf]
    %v320 = vld [vmem:[#allocation8 + $0x44] sm:$0xf]
    %v321 = vld [vmem:[#allocation8 + $0x48] sm:$0xf]
    %v322 = vld [vmem:[#allocation8 + $0x4c] sm:$0xf]
    %v323 = vld [vmem:[#allocation8 + $0x50] sm:$0xf]
    %v324 = vld [vmem:[#allocation8 + $0x54] sm:$0xf]
    %v325 = vld [vmem:[#allocation8 + $0x58] sm:$0xf]
    %v326 = vld [vmem:[#allocation8 + $0x5c] sm:$0xf]
    %v327 = vld [vmem:[#allocation8 + $0x60] sm:$0xf]
    %v328 = vld [vmem:[#allocation8 + $0x64] sm:$0xf]
    %v329 = vld [vmem:[#allocation8 + $0x68] sm:$0xf]
    %v330 = vld [vmem:[#allocation8 + $0x6c] sm:$0xf]
    %v331 = vld [vmem:[#allocation8 + $0x70] sm:$0xf]
    %v332 = vld [vmem:[#allocation8 + $0x74] sm:$0xf]
    %v333 = vld [vmem:[#allocation8 + $0x78] sm:$0xf]
    %v334 = vld [vmem:[#allocation8 + $0x7c] sm:$0xf]
    %v367 = vunpack.c.l.b16 %v303
    %v368 = vunpack.c.l.b16 %v304
    %v369 = vunpack.c.l.b16 %v305
    %v370 = vunpack.c.l.b16 %v306
    %v371 = vunpack.c.l.b16 %v307
    %v372 = vunpack.c.l.b16 %v308
    %v373 = vunpack.c.l.b16 %v309
    %v374 = vunpack.c.l.b16 %v310
    %v375 = vunpack.c.l.b16 %v311
    %v376 = vunpack.c.l.b16 %v312
    %v377 = vunpack.c.l.b16 %v313
    %v378 = vunpack.c.l.b16 %v314
    %v379 = vunpack.c.l.b16 %v315
    %v380 = vunpack.c.l.b16 %v316
    %v381 = vunpack.c.l.b16 %v317
    %v382 = vunpack.c.l.b16 %v318
    %v383 = vunpack.c.l.b16 %v319
    %v384 = vunpack.c.l.b16 %v320
    %v385 = vunpack.c.l.b16 %v321
    %v386 = vunpack.c.l.b16 %v322
    %v387 = vunpack.c.l.b16 %v323
    %v388 = vunpack.c.l.b16 %v324
    %v389 = vunpack.c.l.b16 %v325
    %v390 = vunpack.c.l.b16 %v326
    %v391 = vunpack.c.l.b16 %v327
    %v392 = vunpack.c.l.b16 %v328
    %v393 = vunpack.c.l.b16 %v329
    %v394 = vunpack.c.l.b16 %v330
    %v395 = vunpack.c.l.b16 %v331
    %v396 = vunpack.c.l.b16 %v332
    %v397 = vunpack.c.l.b16 %v333
    %v398 = vunpack.c.l.b16 %v334
    %v399 = vpack.c.b16 %v368, %v367
    %v400 = vpack.c.b16 %v370, %v369
    %v401 = vpack.c.b16 %v372, %v371
    %v402 = vpack.c.b16 %v374, %v373
    %v403 = vpack.c.b16 %v376, %v375
    %v404 = vpack.c.b16 %v378, %v377
    %v405 = vpack.c.b16 %v380, %v379
    %v406 = vpack.c.b16 %v382, %v381
    %v407 = vpack.c.b16 %v384, %v383
    %v408 = vpack.c.b16 %v386, %v385
    %v409 = vpack.c.b16 %v388, %v387
    %v410 = vpack.c.b16 %v390, %v389
    %v411 = vpack.c.b16 %v392, %v391
    %v412 = vpack.c.b16 %v394, %v393
    %v413 = vpack.c.b16 %v396, %v395
    %v414 = vpack.c.b16 %v398, %v397
    %431 = vmatprep.subr.bf16.mxu0 0
    %432 = vmatpush1.bf16.msra.mxu0 %v399
    %433 = vmatprep.subr.bf16.mxu0 0
    %434 = vmatpush1.bf16.msra.mxu0 %v400
    %435 = vmatprep.subr.bf16.mxu0 0
    %436 = vmatpush1.bf16.msra.mxu0 %v401
    %437 = vmatprep.subr.bf16.mxu0 0
    %438 = vmatpush1.bf16.msra.mxu0 %v402
    %439 = vmatprep.subr.bf16.mxu0 0
    %440 = vmatpush1.bf16.msra.mxu0 %v403
    %441 = vmatprep.subr.bf16.mxu0 0
    %442 = vmatpush1.bf16.msra.mxu0 %v404
    %443 = vmatprep.subr.bf16.mxu0 0
    %444 = vmatpush1.bf16.msra.mxu0 %v405
    %445 = vmatprep.subr.bf16.mxu0 0
    %446 = vmatpush1.bf16.msra.mxu0 %v406
    %447 = vmatprep.subr.bf16.mxu0 0
    %448 = vmatpush1.bf16.msra.mxu0 %v407
    %449 = vmatprep.subr.bf16.mxu0 0
    %450 = vmatpush1.bf16.msra.mxu0 %v408
    %451 = vmatprep.subr.bf16.mxu0 0
    %452 = vmatpush1.bf16.msra.mxu0 %v409
    %453 = vmatprep.subr.bf16.mxu0 0
    %454 = vmatpush1.bf16.msra.mxu0 %v410
    %455 = vmatprep.subr.bf16.mxu0 0
    %456 = vmatpush1.bf16.msra.mxu0 %v411
    %457 = vmatprep.subr.bf16.mxu0 0
    %458 = vmatpush1.bf16.msra.mxu0 %v412
    %459 = vmatprep.subr.bf16.mxu0 0
    %460 = vmatpush1.bf16.msra.mxu0 %v413
    %461 = vmatprep.subr.bf16.mxu0 0
    %462 = vmatpush1.bf16.msra.mxu0 %v414
    %463 = vmatprep.mubr.bf16.mxu0 %v302
    %464 = vmatmul.mubr.bf16.gmra.mrb[0].mxu0 %v301
    %v465 = vpop.f32.mrb[0].mxu0
    %v466 = vadd.f32 0.0, %v465
    %v467 = vpop.f32.mrb[0].mxu0
    %v468 = vpop.f32.mrb[0].mxu0
    %v469 = vpop.f32.mrb[0].mxu0
    %470 = vdwg.mxu0
    %v471 = vrot.slane %v466, 4
    %v472 = vadd.f32 %v466, %v471
    %v473 = vrot.slane %v472, 2
    %v474 = vadd.f32 %v472, %v473
    %v475 = vrot.slane %v474, 1
    %v476 = vadd.f32 %v474, %v475
    %v477 = vmul.f32 %v476, 0.125
    %v478 = vmul.f32 %v466, %v466
    %v479 = vrot.slane %v478, 4
    %v480 = vadd.f32 %v478, %v479
    %v481 = vrot.slane %v480, 2
    %v482 = vadd.f32 %v480, %v481
    %v483 = vrot.slane %v482, 1
    %v484 = vadd.f32 %v482, %v483
    %v485 = vmul.f32 %v484, 0.125
    %v486 = vmul.f32 %v477, %v477
    %v487 = vsub.f32 %v485, %v486
    %v488 = vmax.f32 %v487, 0.0
    %v489 = vadd.f32 %v488, 1e-05
    %v490 = vrsqrt.pop %v489
    %v491 = vmul.f32 %v93, %v490
    %v492 = vmul.f32 %v477, %v491
    %v493 = vsub.f32 %v94, %v492
    %v494 = vmul.f32 %v466, %v491
    %v495 = vadd.f32 %v494, %v493
    %v496 = vmax.f32 %v495, 0.0
    %v497 = vpack.c.bf16 %v496, %v496
    %v498 = vld [vmem:[#allocation10] sm:$0xf]
    %v499 = vld [vmem:[#allocation10 + $0x4] sm:$0xf]
    %v500 = vld [vmem:[#allocation10 + $0x8] sm:$0xf]
    %v501 = vld [vmem:[#allocation10 + $0xc] sm:$0xf]
    %v502 = vld [vmem:[#allocation10 + $0x10] sm:$0xf]
    %v503 = vld [vmem:[#allocation10 + $0x14] sm:$0xf]
    %v504 = vld [vmem:[#allocation10 + $0x18] sm:$0xf]
    %v505 = vld [vmem:[#allocation10 + $0x1c] sm:$0xf]
    %v506 = vld [vmem:[#allocation10 + $0x20] sm:$0xf]
    %v507 = vld [vmem:[#allocation10 + $0x24] sm:$0xf]
    %v508 = vld [vmem:[#allocation10 + $0x28] sm:$0xf]
    %v509 = vld [vmem:[#allocation10 + $0x2c] sm:$0xf]
    %v510 = vld [vmem:[#allocation10 + $0x30] sm:$0xf]
    %v511 = vld [vmem:[#allocation10 + $0x34] sm:$0xf]
    %v512 = vld [vmem:[#allocation10 + $0x38] sm:$0xf]
    %v513 = vld [vmem:[#allocation10 + $0x3c] sm:$0xf]
    %v530 = vunpack.c.l.b16 %v498
    %v531 = vunpack.c.l.b16 %v499
    %v532 = vunpack.c.l.b16 %v500
    %v533 = vunpack.c.l.b16 %v501
    %v534 = vunpack.c.l.b16 %v502
    %v535 = vunpack.c.l.b16 %v503
    %v536 = vunpack.c.l.b16 %v504
    %v537 = vunpack.c.l.b16 %v505
    %v538 = vunpack.c.l.b16 %v506
    %v539 = vunpack.c.l.b16 %v507
    %v540 = vunpack.c.l.b16 %v508
    %v541 = vunpack.c.l.b16 %v509
    %v542 = vunpack.c.l.b16 %v510
    %v543 = vunpack.c.l.b16 %v511
    %v544 = vunpack.c.l.b16 %v512
    %v545 = vunpack.c.l.b16 %v513
    %v546 = vpack.c.b16 %v531, %v530
    %v547 = vpack.c.b16 %v533, %v532
    %v548 = vpack.c.b16 %v535, %v534
    %v549 = vpack.c.b16 %v537, %v536
    %v550 = vpack.c.b16 %v539, %v538
    %v551 = vpack.c.b16 %v541, %v540
    %v552 = vpack.c.b16 %v543, %v542
    %v553 = vpack.c.b16 %v545, %v544
    %562 = vmatprep.subr.bf16.mxu0 0
    %563 = vmatpush1.bf16.msra.mxu0 %v546
    %564 = vmatprep.subr.bf16.mxu0 0
    %565 = vmatpush1.bf16.msra.mxu0 %v547
    %566 = vmatprep.subr.bf16.mxu0 0
    %567 = vmatpush1.bf16.msra.mxu0 %v548
    %568 = vmatprep.subr.bf16.mxu0 0
    %569 = vmatpush1.bf16.msra.mxu0 %v549
    %570 = vmatprep.subr.bf16.mxu0 0
    %571 = vmatpush1.bf16.msra.mxu0 %v550
    %572 = vmatprep.subr.bf16.mxu0 0
    %573 = vmatpush1.bf16.msra.mxu0 %v551
    %574 = vmatprep.subr.bf16.mxu0 0
    %575 = vmatpush1.bf16.msra.mxu0 %v552
    %576 = vmatprep.subr.bf16.mxu0 0
    %577 = vmatpush1.bf16.msra.mxu0 %v553
    %578 = vmatprep.subr.bf16.mxu0 0
    %579 = vmatpush1.bf16.msra.mxu0 0
    %580 = vmatprep.subr.bf16.mxu0 0
    %581 = vmatpush1.bf16.msra.mxu0 0
    %582 = vmatprep.subr.bf16.mxu0 0
    %583 = vmatpush1.bf16.msra.mxu0 0
    %584 = vmatprep.subr.bf16.mxu0 0
    %585 = vmatpush1.bf16.msra.mxu0 0
    %586 = vmatprep.subr.bf16.mxu0 0
    %587 = vmatpush1.bf16.msra.mxu0 0
    %588 = vmatprep.subr.bf16.mxu0 0
    %589 = vmatpush1.bf16.msra.mxu0 0
    %590 = vmatprep.subr.bf16.mxu0 0
    %591 = vmatpush1.bf16.msra.mxu0 0
    %592 = vmatprep.subr.bf16.mxu0 0
    %593 = vmatpush1.bf16.msra.mxu0 0
    %594 = vmatprep.mubr.bf16.mxu0 0
    %595 = vmatmul.mubr.bf16.gmra.mrb[0].mxu0 %v497
    %v596 = vpop.f32.mrb[0].mxu0
    %v597 = vadd.f32 %v95, %v596
    %v598 = vpop.f32.mrb[0].mxu0
    %v599 = vpop.f32.mrb[0].mxu0
    %v600 = vpop.f32.mrb[0].mxu0
    %601 = vdwg.mxu0
    %v602 = vtanh.pop %v597
    %603 = vst [vmem:[#allocation11] sm:$0xff] %v602
    // Predicated region
    $region42: #{tpu_custom_call.1} parent=1 // pred_check
      _
    $region43: #{tpu_custom_call.1} parent=1 // pred_check_branch
      %605 = sbr.rel (0) target = $region45
    $region44: #{tpu_custom_call.1} parent=1 // pred_region
      %s607 = ssub.s32 128, 128
      %608 = vsyncadd [#allocation4], %s607
      %s610 = sshll.u32 [#allocation11], 4
      %s611 = int_to_ptr.vmem [resolvable:$true] %s610
      %613 = dma.vmem_to_hbm [thread:$0]  %s611, 128, %s5, [#allocation4]
    $region45: #{tpu_custom_call.1} parent=1 // pred_fallthru
      _
    // Predicated region
    $region46: #{tpu_custom_call.1} parent=1 // pred_check
      _
    $region47: #{tpu_custom_call.1} parent=1 // pred_check_branch
      %615 = sbr.rel (0) target = $region49
    $region48: #{tpu_custom_call.1} parent=1 // pred_region
      %616 = dma.done [#allocation4], 128
    $region49: #{tpu_custom_call.1} parent=1 // pred_fallthru
      _
    %617 = vsyncpa [#allocation3], 1
    %618 = vsyncpa [#allocation6], 1
    %619 = vsyncpa [#allocation9], 1
    %620 = vsyncpa [#allocation4], 1

</llo_original>
